<compile_context>
chip_gen: v5e
topology: v5e:2x2
jax: 0.10.0
libtpu: 0.0.40
codegen_flags: <defaults>
</compile_context>

<pallas_src>
import functools

import jax
import jax.numpy as jnp
from jax.experimental import pallas as pl
from jax.experimental.pallas import tpu as pltpu

_EPS = 1e-12  # F.normalize default eps


def _l2_normalize_rows(x):
    # v / max(||v||_2, eps)  ==  v * rsqrt(max(sum(v^2), eps^2))
    sumsq = jnp.sum(x * x, axis=-1, keepdims=True)
    return x * jax.lax.rsqrt(jnp.maximum(sumsq, _EPS * _EPS))


def _fc_title_kernel(x_ref, w_ref, vecs_ref, ww_ref, *, inv_seq_len):
    # x_ref:    (TB, S, H) batch tile of token embeddings
    # w_ref:    (1, H)     lane-dense Linear(H -> 1) weight
    # vecs_ref: (TB, H)    per-step output block (lane-dense, unmasked store)
    # ww_ref:   (TB, S)    per-step output block (lane-dense, unmasked store)
    x = x_ref[...]                                   # (TB, S, H)
    w = w_ref[...]                                   # (1, H)

    # word weight: Linear(H -> 1, bias=False)  -> (TB, S)
    ww = jnp.sum(x * w[None, :, :], axis=-1)

    # weighted mean over the sequence axis -> (TB, H)
    vec = jnp.sum(x * ww[:, :, None], axis=1) * inv_seq_len

    vecs_ref[...] = _l2_normalize_rows(vec)
    ww_ref[...] = ww


def _normalize_kernel(x_ref, o_ref):
    # x_ref/o_ref: (TB, H).  Row-wise L2 normalization (F.normalize, dim=1).
    o_ref[...] = _l2_normalize_rows(x_ref[...])


def _batch_tile(batch, row_bytes, target_block_bytes=8 * 1024 * 1024):
    """Largest batch tile whose block stays under the VMEM budget.

    If the whole batch fits, use it (block shape == full array dims, so no
    (8,128) constraint).  Otherwise round the tile down to a multiple of 8 so
    the (TB, H)/(TB, S) output blocks satisfy the sublane rule.
    """
    tb = int(max(1, target_block_bytes // max(int(row_bytes), 1)))
    if tb >= batch:
        return batch
    return max(8, (tb // 8) * 8)


def _pad_batch(x, b_pad):
    b = x.shape[0]
    if b == b_pad:
        return x
    pad = [(0, b_pad - b)] + [(0, 0)] * (x.ndim - 1)
    return jnp.pad(x, pad)


def fc_model_forward(token_embeddings, pooler_output, attention_mask, weight,
                     encoder_type="title", batch_tile=None):
    """Pallas implementation of _FCModel.forward.

    token_embeddings: [B, S, H] float32
    pooler_output:    [B, H]    float32
    attention_mask:   [B, S]    (unused, kept for signature parity)
    weight:           [1, H]    float32 (word_weight_fc.weight, PyTorch layout)
    batch_tile:       optional override of the batch tile size (testing).
    """
    del attention_mask  # unused in the reference forward as well

    if encoder_type == "title":
        token_embeddings = token_embeddings.astype(jnp.float32)
        B, S, H = token_embeddings.shape
        weight = jnp.asarray(weight, jnp.float32).reshape(1, H)  # lane-dense

        row_bytes = S * H * 4
        TB = batch_tile if batch_tile is not None else _batch_tile(B, row_bytes)
        TB = min(TB, B) if TB >= B else TB
        B_pad = ((B + TB - 1) // TB) * TB
        x = _pad_batch(token_embeddings, B_pad)

        # Double-buffered input block + double-buffered output blocks + headroom.
        vmem_limit = max(32 * 1024 * 1024,
                         4 * TB * (S * H + H + S) * 4 + (2 << 20))

        kernel = functools.partial(_fc_title_kernel, inv_seq_len=1.0 / S)
        vecs, word_weight = pl.pallas_call(
            kernel,
            out_shape=(
                jax.ShapeDtypeStruct((B_pad, H), jnp.float32),
                jax.ShapeDtypeStruct((B_pad, S), jnp.float32),
            ),
            grid=(B_pad // TB,),
            in_specs=[
                pl.BlockSpec((TB, S, H), lambda b: (b, 0, 0)),
                pl.BlockSpec((1, H), lambda b: (0, 0)),
            ],
            out_specs=(
                pl.BlockSpec((TB, H), lambda b: (b, 0)),
                pl.BlockSpec((TB, S), lambda b: (b, 0)),
            ),
            compiler_params=pltpu.CompilerParams(
                dimension_semantics=("parallel",),
                vmem_limit_bytes=int(vmem_limit)),
        )(x, weight)

        if B_pad != B:
            vecs = vecs[:B]
            word_weight = word_weight[:B]
        return vecs, word_weight
    else:
        pooler_output = pooler_output.astype(jnp.float32)
        B, H = pooler_output.shape
        TB = batch_tile if batch_tile is not None else _batch_tile(
            B, H * 4, target_block_bytes=4 * 1024 * 1024)
        TB = min(TB, B) if TB >= B else TB
        B_pad = ((B + TB - 1) // TB) * TB
        x = _pad_batch(pooler_output, B_pad)

        vecs = pl.pallas_call(
            _normalize_kernel,
            out_shape=jax.ShapeDtypeStruct((B_pad, H), jnp.float32),
            grid=(B_pad // TB,),
            in_specs=[pl.BlockSpec((TB, H), lambda b: (b, 0))],
            out_specs=pl.BlockSpec((TB, H), lambda b: (b, 0)),
            compiler_params=pltpu.CompilerParams(
                dimension_semantics=("parallel",),
                vmem_limit_bytes=32 * 1024 * 1024),
        )(x)

        if B_pad != B:
            vecs = vecs[:B]
        return vecs, None


def _reference(token_embeddings, pooler_output, weight, encoder_type="title"):
    """Plain-JAX reference mirroring the PyTorch module."""
    if encoder_type == "title":
        ww = jnp.einsum("bsh,oh->bso", token_embeddings, weight)    # [B, S, 1]
        weighted = token_embeddings * ww
        vecs = jnp.mean(weighted, axis=1)
        vecs = vecs / jnp.maximum(
            jnp.linalg.norm(vecs, axis=1, keepdims=True), _EPS)
        return vecs, ww[..., 0]
    else:
        vecs = pooler_output / jnp.maximum(
            jnp.linalg.norm(pooler_output, axis=1, keepdims=True), _EPS)
        return vecs, None


if __name__ == "__main__":
    B, S, H = 2, 8, 32

    key = jax.random.PRNGKey(0)
    k_tok, k_pool, k_w, k_tok2 = jax.random.split(key, 4)

    token_embeddings = jax.random.normal(k_tok, (B, S, H), dtype=jnp.float32)
    pooler_output = jax.random.normal(k_pool, (B, H), dtype=jnp.float32)
    attention_mask = jnp.ones((B, S), dtype=jnp.float32)

    # nn.Linear(H, 1, bias=False).weight has shape (1, H); init U(-1/sqrt(H), 1/sqrt(H)).
    bound = 1.0 / (H ** 0.5)
    weight = jax.random.uniform(k_w, (1, H), minval=-bound, maxval=bound,
                                dtype=jnp.float32)

    # 'title' branch (single full-batch tile)
    vecs, word_weight = fc_model_forward(
        token_embeddings, pooler_output, attention_mask, weight,
        encoder_type="title")
    jax.block_until_ready((vecs, word_weight))
    ref_vecs, ref_ww = _reference(token_embeddings, pooler_output, weight,
                                  encoder_type="title")
    assert jnp.allclose(vecs, ref_vecs, atol=1e-5, rtol=1e-5)
    assert jnp.allclose(word_weight, ref_ww, atol=1e-5, rtol=1e-5)

    # 'title' branch with forced batch tiling + padding (exercise grid > 1)
    B2 = 20
    token_embeddings2 = jax.random.normal(k_tok2, (B2, S, H), dtype=jnp.float32)
    attention_mask2 = jnp.ones((B2, S), dtype=jnp.float32)
    vecs_t, ww_t = fc_model_forward(
        token_embeddings2, pooler_output, attention_mask2, weight,
        encoder_type="title", batch_tile=8)
    jax.block_until_ready((vecs_t, ww_t))
    ref_vecs_t, ref_ww_t = _reference(token_embeddings2, pooler_output, weight,
                                      encoder_type="title")
    assert vecs_t.shape == (B2, H) and ww_t.shape == (B2, S)
    assert jnp.allclose(vecs_t, ref_vecs_t, atol=1e-5, rtol=1e-5)
    assert jnp.allclose(ww_t, ref_ww_t, atol=1e-5, rtol=1e-5)

    # non-'title' branch
    vecs2, none_out = fc_model_forward(
        token_embeddings, pooler_output, attention_mask, weight,
        encoder_type="other")
    jax.block_until_ready(vecs2)
    ref_vecs2, _ = _reference(token_embeddings, pooler_output, weight,
                              encoder_type="other")
    assert none_out is None
    assert jnp.allclose(vecs2, ref_vecs2, atol=1e-5, rtol=1e-5)

    print("KERNEL_OK")
</pallas_src>

<mosaic_0001>
module attributes {stable_mosaic.version = 11 : i64} {
  func.func @_fc_title_kernel(%arg0: i32, %arg1: memref<2x8x32xf32, #tpu.memory_space<vmem>>, %arg2: memref<1x32xf32, #tpu.memory_space<vmem>>, %arg3: memref<2x32xf32, #tpu.memory_space<vmem>>, %arg4: memref<2x8xf32, #tpu.memory_space<vmem>>) attributes {dimension_semantics = [#tpu.dimension_semantics<parallel>], iteration_bounds = array<i64: 1>, scalar_prefetch = 0 : i64, scratch_operands = 0 : i64, tpu.core_type = #tpu.core_type<tc>, window_params = [{transform_indices = @transform_0, window_bounds = array<i64: 2, 8, 32>}, {pipeline_mode = #tpu.pipeline_mode<synchronous>, transform_indices = @transform_1, window_bounds = array<i64: 1, 32>}, {transform_indices = @transform_2, window_bounds = array<i64: 2, 32>}, {transform_indices = @transform_3, window_bounds = array<i64: 2, 8>}]} {
    %c0 = arith.constant 0 : index
    %c0_0 = arith.constant 0 : index
    %c0_1 = arith.constant 0 : index
    %0 = vector.load %arg1[%c0, %c0_0, %c0_1] : memref<2x8x32xf32, #tpu.memory_space<vmem>>, vector<2x8x32xf32>
    %c0_2 = arith.constant 0 : index
    %c0_3 = arith.constant 0 : index
    %1 = vector.load %arg2[%c0_2, %c0_3] : memref<1x32xf32, #tpu.memory_space<vmem>>, vector<1x32xf32>
    %2 = vector.shape_cast %1 : vector<1x32xf32> to vector<1x1x32xf32>
    %3 = vector.broadcast %2 : vector<1x1x32xf32> to vector<2x8x32xf32>
    %4 = arith.mulf %0, %3 : vector<2x8x32xf32>
    %cst = arith.constant dense<0.000000e+00> : vector<2x8xf32>
    %5 = vector.multi_reduction <add>, %4, %cst [2] : vector<2x8x32xf32> to vector<2x8xf32>
    %6 = vector.shape_cast %5 : vector<2x8xf32> to vector<2x8x1xf32>
    %7 = vector.broadcast %6 : vector<2x8x1xf32> to vector<2x8x32xf32>
    %8 = arith.mulf %0, %7 : vector<2x8x32xf32>
    %cst_4 = arith.constant dense<0.000000e+00> : vector<2x32xf32>
    %9 = vector.multi_reduction <add>, %8, %cst_4 [1] : vector<2x8x32xf32> to vector<2x32xf32>
    %cst_5 = arith.constant 1.250000e-01 : f32
    %10 = vector.broadcast %cst_5 : f32 to vector<2x32xf32>
    %11 = arith.mulf %9, %10 : vector<2x32xf32>
    %12 = arith.mulf %11, %11 : vector<2x32xf32>
    %cst_6 = arith.constant dense<0.000000e+00> : vector<2xf32>
    %13 = vector.multi_reduction <add>, %12, %cst_6 [1] : vector<2x32xf32> to vector<2xf32>
    %14 = vector.shape_cast %13 : vector<2xf32> to vector<2x1xf32>
    %cst_7 = arith.constant 1.000000e-24 : f32
    %15 = vector.broadcast %cst_7 : f32 to vector<2x1xf32>
    %16 = arith.maximumf %14, %15 : vector<2x1xf32>
    %17 = math.rsqrt %16 : vector<2x1xf32>
    %18 = vector.broadcast %17 : vector<2x1xf32> to vector<2x32xf32>
    %19 = arith.mulf %11, %18 : vector<2x32xf32>
    %c0_8 = arith.constant 0 : index
    %c0_9 = arith.constant 0 : index
    %20 = vector.load %arg3[%c0_8, %c0_9] : memref<2x32xf32, #tpu.memory_space<vmem>>, vector<2x32xf32>
    tpu.vector_store %arg3[%c0_8, %c0_9], %19 {strides = array<i32>} : memref<2x32xf32, #tpu.memory_space<vmem>>, vector<2x32xf32>,
    %c0_10 = arith.constant 0 : index
    %c0_11 = arith.constant 0 : index
    %21 = vector.load %arg4[%c0_10, %c0_11] : memref<2x8xf32, #tpu.memory_space<vmem>>, vector<2x8xf32>
    tpu.vector_store %arg4[%c0_10, %c0_11], %5 {strides = array<i32>} : memref<2x8xf32, #tpu.memory_space<vmem>>, vector<2x8xf32>,
    return
  }
  func.func @transform_0(%arg0: i32) -> (i32, i32, i32) {
    %c0_i32 = arith.constant 0 : i32
    %c0_i32_0 = arith.constant 0 : i32
    %c0_i32_1 = arith.constant 0 : i32
    return %arg0, %c0_i32, %c0_i32_0 : i32, i32, i32
  }
  func.func @transform_1(%arg0: i32) -> (i32, i32) {
    %c0_i32 = arith.constant 0 : i32
    %c0_i32_0 = arith.constant 0 : i32
    %c0_i32_1 = arith.constant 0 : i32
    return %c0_i32, %c0_i32_0 : i32, i32
  }
  func.func @transform_2(%arg0: i32) -> (i32, i32) {
    %c0_i32 = arith.constant 0 : i32
    %c0_i32_0 = arith.constant 0 : i32
    return %arg0, %c0_i32 : i32, i32
  }
  func.func @transform_3(%arg0: i32) -> (i32, i32) {
    %c0_i32 = arith.constant 0 : i32
    %c0_i32_0 = arith.constant 0 : i32
    return %arg0, %c0_i32 : i32, i32
  }
}

</mosaic_0001>

<llo_original>
// kernel: tpu_custom_call.1
$region0: #{tpu_custom_call.1}
  #allocation0 [shape = 'u32[]', space=smem, size = 0x4, offset = 0x4, fixed_abs, tag = 'smem constant byte address 0x4 - core index']
  #allocation1 [shape = 'u32[72,128]{1,0:T(1,128)}', space=vmem, size = 0x9000, scoped, tag = 'internal scratch']
  %s0 = inlined_call_operand.hbm [shape: f32[2,8,32], index: 0, kind: input, shape index: {}]
  %s1 = inlined_call_operand.hbm [shape: f32[1,32], index: 1, kind: input, shape index: {}]
  %s2 = inlined_call_operand.hbm [shape: f32[2,32], index: 2, kind: output, shape index: {0}]
  %s3 = inlined_call_operand.hbm [shape: f32[2,8], index: 3, kind: output, shape index: {1}]
  %4 = xla_tuple %s2, %s3
  %s5 = sld [smem:[#allocation0]]
  $region34: #{tpu_custom_call.1} parent=0
    _
  %s7 = ssub.s32 1, %s5
  %s8 = scalar_select 0, %s7, %s5
  $region1: #{tpu_custom_call.1} parent=0
    #allocation2 [shape = 'u8[8192]{0}', space=vmem, size = 0x2000, scoped, tag = 'input window, operand 0, single buffered']
    #allocation3 [shape = 's32[1]{0}', space=sflag, size = 0x4, scoped, tag = 'scoped memory for tpu_custom_call.1']
    #allocation4 [shape = 's32[1]{0}', space=sflag, size = 0x4, scoped, tag = 'scoped memory for tpu_custom_call.1']
    #allocation5 [shape = 'u8[512]{0}', space=vmem, size = 0x400, scoped, tag = 'input window, operand 1, single buffered']
    #allocation6 [shape = 's32[1]{0}', space=sflag, size = 0x4, scoped, tag = 'scoped memory for tpu_custom_call.1']
    #allocation7 [shape = 'u8[1024]{0}', space=vmem, size = 0x400, scoped, tag = 'output window, operand 0, single buffered']
    #allocation8 [shape = 'u8[1024]{0}', space=vmem, size = 0x400, scoped, tag = 'output window, operand 1, single buffered']
    #allocation9 [shape = 's32[1]{0}', space=sflag, size = 0x4, scoped, tag = 'scoped memory for tpu_custom_call.1']
    %9 = vsyncpa [#allocation3], 0
    %10 = vsyncpa [#allocation6], 0
    %11 = vsyncpa [#allocation4], 0
    %12 = vsyncpa [#allocation9], 0
    // Predicated region
    $region2: #{tpu_custom_call.1} parent=1 // pred_check
      _
    $region3: #{tpu_custom_call.1} parent=1 // pred_check_branch
      %14 = sbr.rel (0) target = $region5
    $region4: #{tpu_custom_call.1} parent=1 // pred_region
      %16 = vsyncadd [#allocation3], 0
      %s17 = sshll.u32 %s0, 4
      %s18 = int_to_ptr.hbm [resolvable:$true] %s17
      %s19 = sshll.u32 [#allocation2], 4
      %s20 = int_to_ptr.vmem [resolvable:$true] %s19
      %25 = dma.hbm_to_vmem [thread:$0]  %s18, 256, %s20, [#allocation3], 128, 128, 8
    $region5: #{tpu_custom_call.1} parent=1 // pred_fallthru
      _
    // Predicated region
    $region6: #{tpu_custom_call.1} parent=1 // pred_check
      _
    $region7: #{tpu_custom_call.1} parent=1 // pred_check_branch
      %27 = sbr.rel (0) target = $region9
    $region8: #{tpu_custom_call.1} parent=1 // pred_region
      %29 = vsyncadd [#allocation6], 0
      %s31 = sshll.u32 %s1, 4
      %s32 = int_to_ptr.hbm [resolvable:$true] %s31
      %s33 = sshll.u32 [#allocation5], 4
      %s34 = int_to_ptr.vmem [resolvable:$true] %s33
      %36 = dma.hbm_to_vmem [thread:$0]  %s32, 16, %s34, [#allocation6]
    $region9: #{tpu_custom_call.1} parent=1 // pred_fallthru
      _
    // Predicated region
    $region10: #{tpu_custom_call.1} parent=1 // pred_check
      _
    $region11: #{tpu_custom_call.1} parent=1 // pred_check_branch
      %38 = sbr.rel (0) target = $region13
    $region12: #{tpu_custom_call.1} parent=1 // pred_region
      %40 = dma.done [#allocation3], 256
    $region13: #{tpu_custom_call.1} parent=1 // pred_fallthru
      _
    // Predicated region
    $region14: #{tpu_custom_call.1} parent=1 // pred_check
      _
    $region15: #{tpu_custom_call.1} parent=1 // pred_check_branch
      %42 = sbr.rel (0) target = $region17
    $region16: #{tpu_custom_call.1} parent=1 // pred_region
      %44 = dma.done [#allocation6], 16
    $region17: #{tpu_custom_call.1} parent=1 // pred_fallthru
      _
    %v45 = vld [vmem:[#allocation2] sm:$0xff]
    %v46 = vld [vmem:[#allocation2 + $0x8] sm:$0xff]
    %v47 = vld [vmem:[#allocation5] sm:$0x1]
    %v49 = vperm.slane %v47, 0
    %v51 = vmul.f32 %v45, %v49
    %v52 = vmul.f32 %v46, %v49
    %vm53 = vcmask 261120
    %v54 = vsel %vm53, %v51, 0.0
    %55 = vadd.xlane.f32.xlu0 %v54
    %v56 = vpop.xlane.xlu0 %55
    %v57 = vsel %vm53, %v52, 0.0
    %58 = vadd.xlane.f32.xlu0 %v57
    %v59 = vpop.xlane.xlu0 %58
    %v60 = vmul.f32 %v45, %v56
    %v61 = vmul.f32 %v46, %v59
    %v62 = vsel %vm53, %v60, 0.0
    %v63 = vrot.slane %v62, 4
    %v64 = vadd.f32 %v62, %v63
    %v65 = vrot.slane %v64, 2
    %v66 = vadd.f32 %v64, %v65
    %v67 = vrot.slane %v66, 1
    %v68 = vadd.f32 %v66, %v67
    %v69 = vsel %vm53, %v61, 0.0
    %v70 = vrot.slane %v69, 4
    %v71 = vadd.f32 %v69, %v70
    %v72 = vrot.slane %v71, 2
    %v73 = vadd.f32 %v71, %v72
    %v74 = vrot.slane %v73, 1
    %v75 = vadd.f32 %v73, %v74
    %v76 = vmul.f32 %v68, 0.125
    %v77 = vmul.f32 %v75, 0.125
    %v78 = vmul.f32 %v76, %v76
    %v79 = vmul.f32 %v77, %v77
    %vm82 = vcmask 1041409
    %v83 = vsel %vm82, %v79, %v78
    %vm85 = vcmask 254976
    %v86 = vsel %vm85, %v83, 0.0
    %87 = vadd.xlane.f32.xlu0 %v86
    %v88 = vpop.xlane.xlu0 %87
    %v89 = vmax.f32 %v88, 1e-24
    %v90 = vrsqrt.pop %v89
    %v91 = vmul.f32 %v90, %v89
    %v92 = vmul.f32 %v91, %v90
    %v93 = vmul.f32 0.5, %v92
    %v94 = vsub.f32 1.5, %v93
    %v95 = vmul.f32 %v90, %v94
    %vm96 = vweird.f32 %v89
    %vm97 = vweird.f32 %v90
    %vm98 = vmor %vm96, %vm97
    %v99 = vsel %vm98, %v90, %v95
    %v101 = vrot.slane %v99, 1
    %v104 = vmul.f32 %v76, %v99
    %v105 = vmul.f32 %v77, %v101
    %v108 = vrot.slane %v105, 7
    %v109 = vsel %vm82, %v108, %v104
    %111 = vst.msk [vmem:[#allocation7] sm:$0x3] %vm85, %v109
    %v114 = vlaneseq
    %v115 = vand.u32 %v114, 127
    %v116 = vperm.slane %v56, %v115
    %v117 = vperm.slane %v59, %v115
    %v118 = vsel %vm82, %v117, %v116
    %vm120 = vcmask 58368
    %121 = vst.msk [vmem:[#allocation8] sm:$0x3] %vm120, %v118
    // Predicated region
    $region18: #{tpu_custom_call.1} parent=1 // pred_check
      _
    $region19: #{tpu_custom_call.1} parent=1 // pred_check_branch
      %123 = sbr.rel (0) target = $region21
    $region20: #{tpu_custom_call.1} parent=1 // pred_region
      %125 = vsyncadd [#allocation4], 0
      %s127 = sshll.u32 [#allocation7], 4
      %s128 = int_to_ptr.vmem [resolvable:$true] %s127
      %s129 = sshll.u32 %s2, 4
      %s130 = int_to_ptr.hbm [resolvable:$true] %s129
      %132 = dma.vmem_to_hbm [thread:$0]  %s128, 32, %s130, [#allocation4]
    $region21: #{tpu_custom_call.1} parent=1 // pred_fallthru
      _
    // Predicated region
    $region22: #{tpu_custom_call.1} parent=1 // pred_check
      _
    $region23: #{tpu_custom_call.1} parent=1 // pred_check_branch
      %134 = sbr.rel (0) target = $region25
    $region24: #{tpu_custom_call.1} parent=1 // pred_region
      %136 = vsyncadd [#allocation9], 0
      %s138 = sshll.u32 [#allocation8], 4
      %s139 = int_to_ptr.vmem [resolvable:$true] %s138
      %s140 = sshll.u32 %s3, 4
      %s141 = int_to_ptr.hbm [resolvable:$true] %s140
      %143 = dma.vmem_to_hbm [thread:$0]  %s139, 32, %s141, [#allocation9]
    $region25: #{tpu_custom_call.1} parent=1 // pred_fallthru
      _
    // Predicated region
    $region26: #{tpu_custom_call.1} parent=1 // pred_check
      _
    $region27: #{tpu_custom_call.1} parent=1 // pred_check_branch
      %145 = sbr.rel (0) target = $region29
    $region28: #{tpu_custom_call.1} parent=1 // pred_region
      %147 = dma.done [#allocation4], 32
    $region29: #{tpu_custom_call.1} parent=1 // pred_fallthru
      _
    // Predicated region
    $region30: #{tpu_custom_call.1} parent=1 // pred_check
      _
    $region31: #{tpu_custom_call.1} parent=1 // pred_check_branch
      %149 = sbr.rel (0) target = $region33
    $region32: #{tpu_custom_call.1} parent=1 // pred_region
      %151 = dma.done [#allocation9], 32
    $region33: #{tpu_custom_call.1} parent=1 // pred_fallthru
      _
    %152 = vsyncpa [#allocation3], 1
    %153 = vsyncpa [#allocation6], 1
    %154 = vsyncpa [#allocation4], 1
    %155 = vsyncpa [#allocation9], 1

</llo_original>
